<compile_context>
chip_gen: v5e
topology: v5e:2x2
jax: 0.10.0
libtpu: 0.0.40
codegen_flags: <defaults>
</compile_context>

<pallas_src>
import math
import jax
import jax.numpy as jnp
from jax.experimental import pallas as pl
from jax.experimental.pallas import tpu as pltpu


def _round_up(x, m):
    return ((x + m - 1) // m) * m


def _choose_tile_n(n_rows, requested, min_grid=8):
    """Row-tile size.

    * If one tile covers all rows, use the exact row count (full-extent block:
      no masking, any N allowed).
    * Otherwise a multiple of 8 sublanes, as large as `requested` allows while
      giving at least `min_grid` grid steps (>= 4 steps per TensorCore on
      v7x's two cores so the BlockSpec pipeline has DMA/compute to overlap;
      harmless on single-core v5e/v6e).  The final partial block is masked.
    """
    t = max(8, (int(requested) // 8) * 8)
    if t >= n_rows:
        return n_rows
    steps = max(pl.cdiv(n_rows, t), min_grid)
    return max(8, _round_up(pl.cdiv(n_rows, steps), 8))


def _edge_attr_kernel(x_ref, w1_ref, b1_ref, w2_ref, b2_ref, o_ref):
    # x_ref:  (TN, d_in)      input row tile (f32, as in the PyTorch module)
    # w1_ref: (d_in, d_hid)   resident first-layer weight (f32)
    # b1_ref: (1, d_hid)      f32 bias
    # w2_ref: (d_hid, d_out)  resident second-layer weight (f32)
    # b2_ref: (1, d_out)      f32 bias
    # o_ref:  (TN, d_out)     output row tile (f32 or bf16)
    # MXU matmuls accumulate in f32; bias-add / ReLU stay f32 (VPU-friendly on
    # v5e, which has no bf16 VALU); single downcast at the store.
    h = jnp.dot(x_ref[...], w1_ref[...], preferred_element_type=jnp.float32)
    h = jnp.maximum(h + b1_ref[...], 0.0)                     # act = ReLU
    out = jnp.dot(h, w2_ref[...], preferred_element_type=jnp.float32)
    out = out + b2_ref[...]
    o_ref[...] = out.astype(o_ref.dtype)


def nn_edge_attr(x, w1, b1, w2, b2, *, tile_n=4096, out_dtype=None):
    """Fused Linear -> ReLU -> Linear.

    x:  (N, edge_in_dim)                  f32 (kept as-is in HBM; no copies)
    w1: (edge_in_dim, edge_out_dim)       b1: (edge_out_dim,)
    w2: (edge_out_dim, edge_out_dim**2)   b2: (edge_out_dim**2,)
    out_dtype: dtype of the stored output (e.g. jnp.bfloat16 to halve the
               dominant output HBM traffic).  All arithmetic stays f32.
    returns: (N, edge_out_dim**2) in out_dtype (default: x.dtype)
    """
    N, d_in = x.shape
    d_hid = w1.shape[1]
    d_out = w2.shape[1]

    out_dtype = jnp.dtype(out_dtype) if out_dtype is not None else x.dtype
    b1_2d = b1.reshape(1, d_hid).astype(jnp.float32)
    b2_2d = b2.reshape(1, d_out).astype(jnp.float32)

    # ---- tile / grid selection: no padding, Pallas masks the last block ----
    tn = _choose_tile_n(N, tile_n)
    grid = (pl.cdiv(N, tn),)

    # ---- VMEM budget (lane-padded sizes; narrow dims pad to 128 lanes) -----
    lane = 128
    x_isz = jnp.dtype(x.dtype).itemsize
    w_isz = jnp.dtype(w1.dtype).itemsize
    o_isz = out_dtype.itemsize
    x_tile_vmem = tn * _round_up(d_in, lane) * x_isz          # (tn,32) -> (tn,128)
    o_tile_vmem = tn * _round_up(d_out, lane) * o_isz
    h_vmem = tn * _round_up(d_hid, lane) * 4                  # f32 intermediate
    o_f32_vmem = tn * _round_up(d_out, lane) * 4              # pre-cast f32 result
    w_vmem = (_round_up(d_in, 8) * _round_up(d_hid, lane)
              + _round_up(d_hid, 8) * _round_up(d_out, lane)) * w_isz
    b_vmem = (8 * _round_up(d_hid, lane) + 8 * _round_up(d_out, lane)) * 4
    vmem_limit = (2 * x_tile_vmem + 2 * o_tile_vmem           # double-buffered I/O tiles
                  + h_vmem + o_f32_vmem                       # compiler scratch
                  + 2 * (w_vmem + b_vmem)                     # resident (double-buffered) weights
                  + (4 << 20))                                # slack for Mosaic internals
    vmem_limit = int(min(max(vmem_limit, 32 << 20), 64 << 20))

    # Advisory cost estimate: what the kernel actually moves (mem-bound).
    flops = 2 * N * (d_in * d_hid + d_hid * d_out)
    bytes_accessed = (N * d_in * x_isz + N * d_out * o_isz
                      + (w1.size + w2.size) * w_isz
                      + (b1_2d.size + b2_2d.size) * 4)
    cost = pl.CostEstimate(flops=flops, transcendentals=0,
                           bytes_accessed=bytes_accessed)

    out = pl.pallas_call(
        _edge_attr_kernel,
        out_shape=jax.ShapeDtypeStruct((N, d_out), out_dtype),
        grid_spec=pltpu.PrefetchScalarGridSpec(
            num_scalar_prefetch=0,
            grid=grid,
            in_specs=[
                pl.BlockSpec((tn, d_in), lambda i: (i, 0)),      # x row tile
                pl.BlockSpec((d_in, d_hid), lambda i: (0, 0)),   # W1 (resident)
                pl.BlockSpec((1, d_hid), lambda i: (0, 0)),      # b1
                pl.BlockSpec((d_hid, d_out), lambda i: (0, 0)),  # W2 (resident)
                pl.BlockSpec((1, d_out), lambda i: (0, 0)),      # b2
            ],
            out_specs=pl.BlockSpec((tn, d_out), lambda i: (i, 0)),
        ),
        compiler_params=pltpu.CompilerParams(
            dimension_semantics=("parallel",),
            vmem_limit_bytes=vmem_limit,
        ),
        cost_estimate=cost,
    )(x, w1, b1_2d, w2, b2_2d)

    return out


def _init_linear(key, fan_in, fan_out, dtype=jnp.float32):
    # Matches torch.nn.Linear default init: U(-1/sqrt(fan_in), 1/sqrt(fan_in))
    kw, kb = jax.random.split(key)
    bound = 1.0 / math.sqrt(fan_in)
    w = jax.random.uniform(kw, (fan_in, fan_out), dtype, -bound, bound)
    b = jax.random.uniform(kb, (fan_out,), dtype, -bound, bound)
    return w, b


if __name__ == "__main__":
    edge_in_dim = 32
    edge_out_dim = 16            # -> output dim = 16 * 16 = 256 (lane-dense)
    N = 100                      # number of edges (single full-extent block)

    key = jax.random.PRNGKey(0)
    kx, k1, k2, kx2 = jax.random.split(key, 4)

    x = jax.random.normal(kx, (N, edge_in_dim), jnp.float32)
    w1, b1 = _init_linear(k1, edge_in_dim, edge_out_dim)
    w2, b2 = _init_linear(k2, edge_out_dim, edge_out_dim * edge_out_dim)

    # Pure-JAX reference.
    ref = jnp.maximum(x @ w1 + b1, 0.0) @ w2 + b2

    # f32 output (default): matches the PyTorch module semantics.
    out_f32 = jax.block_until_ready(nn_edge_attr(x, w1, b1, w2, b2))
    assert out_f32.shape == (N, edge_out_dim * edge_out_dim)
    assert out_f32.dtype == jnp.float32
    assert jnp.allclose(out_f32, ref, atol=1e-4, rtol=1e-4)

    # bf16 output: halves the dominant (output) HBM traffic; inputs/weights and
    # all arithmetic stay f32, only the final store is rounded.
    out_bf16 = jax.block_until_ready(
        nn_edge_attr(x, w1, b1, w2, b2, out_dtype=jnp.bfloat16))
    assert out_bf16.shape == (N, edge_out_dim * edge_out_dim)
    assert out_bf16.dtype == jnp.bfloat16
    assert jnp.allclose(out_bf16.astype(jnp.float32), ref, atol=2e-2, rtol=2e-2)

    # Multi-step grid + masked final partial block (N not a tile multiple),
    # exercising the no-pad / no-slice path.
    N2 = 2500
    x2 = jax.random.normal(kx2, (N2, edge_in_dim), jnp.float32)
    ref2 = jnp.maximum(x2 @ w1 + b1, 0.0) @ w2 + b2
    out2 = jax.block_until_ready(nn_edge_attr(x2, w1, b1, w2, b2, tile_n=512))
    assert out2.shape == (N2, edge_out_dim * edge_out_dim)
    assert jnp.allclose(out2, ref2, atol=1e-4, rtol=1e-4)

    print("KERNEL_OK")
</pallas_src>

<mosaic_0001>
module attributes {stable_mosaic.version = 11 : i64} {
  func.func @_edge_attr_kernel(%arg0: i32, %arg1: memref<100x32xf32, #tpu.memory_space<vmem>>, %arg2: memref<32x16xf32, #tpu.memory_space<vmem>>, %arg3: memref<1x16xf32, #tpu.memory_space<vmem>>, %arg4: memref<16x256xf32, #tpu.memory_space<vmem>>, %arg5: memref<1x256xf32, #tpu.memory_space<vmem>>, %arg6: memref<100x256xf32, #tpu.memory_space<vmem>>) attributes {dimension_semantics = [#tpu.dimension_semantics<parallel>], iteration_bounds = array<i64: 1>, scalar_prefetch = 0 : i64, scratch_operands = 0 : i64, tpu.core_type = #tpu.core_type<tc>, window_params = [{transform_indices = @transform_0, window_bounds = array<i64: 100, 32>}, {pipeline_mode = #tpu.pipeline_mode<synchronous>, transform_indices = @transform_1, window_bounds = array<i64: 32, 16>}, {pipeline_mode = #tpu.pipeline_mode<synchronous>, transform_indices = @transform_2, window_bounds = array<i64: 1, 16>}, {pipeline_mode = #tpu.pipeline_mode<synchronous>, transform_indices = @transform_3, window_bounds = array<i64: 16, 256>}, {pipeline_mode = #tpu.pipeline_mode<synchronous>, transform_indices = @transform_4, window_bounds = array<i64: 1, 256>}, {transform_indices = @transform_5, window_bounds = array<i64: 100, 256>}]} {
    %c0 = arith.constant 0 : index
    %c0_0 = arith.constant 0 : index
    %0 = vector.load %arg1[%c0, %c0_0] : memref<100x32xf32, #tpu.memory_space<vmem>>, vector<100x32xf32>
    %c0_1 = arith.constant 0 : index
    %c0_2 = arith.constant 0 : index
    %1 = vector.load %arg2[%c0_1, %c0_2] : memref<32x16xf32, #tpu.memory_space<vmem>>, vector<32x16xf32>
    %cst = arith.constant dense<0.000000e+00> : vector<100x16xf32>
    %2 = tpu.matmul %0, %1, %cst {dimension_numbers = #tpu.dot_dimension_numbers<[1], [0], [0], [1], [0, 0, 1, 1], [], []>} : vector<100x32xf32>, vector<32x16xf32>, vector<100x16xf32> -> vector<100x16xf32>
    %c0_3 = arith.constant 0 : index
    %c0_4 = arith.constant 0 : index
    %3 = vector.load %arg3[%c0_3, %c0_4] : memref<1x16xf32, #tpu.memory_space<vmem>>, vector<1x16xf32>
    %4 = vector.broadcast %3 : vector<1x16xf32> to vector<100x16xf32>
    %5 = arith.addf %2, %4 : vector<100x16xf32>
    %cst_5 = arith.constant 0.000000e+00 : f32
    %6 = vector.broadcast %cst_5 : f32 to vector<100x16xf32>
    %7 = arith.maximumf %5, %6 : vector<100x16xf32>
    %c0_6 = arith.constant 0 : index
    %c0_7 = arith.constant 0 : index
    %8 = vector.load %arg4[%c0_6, %c0_7] : memref<16x256xf32, #tpu.memory_space<vmem>>, vector<16x256xf32>
    %cst_8 = arith.constant dense<0.000000e+00> : vector<100x256xf32>
    %9 = tpu.matmul %7, %8, %cst_8 {dimension_numbers = #tpu.dot_dimension_numbers<[1], [0], [0], [1], [0, 0, 1, 1], [], []>} : vector<100x16xf32>, vector<16x256xf32>, vector<100x256xf32> -> vector<100x256xf32>
    %c0_9 = arith.constant 0 : index
    %c0_10 = arith.constant 0 : index
    %10 = vector.load %arg5[%c0_9, %c0_10] : memref<1x256xf32, #tpu.memory_space<vmem>>, vector<1x256xf32>
    %11 = vector.broadcast %10 : vector<1x256xf32> to vector<100x256xf32>
    %12 = arith.addf %9, %11 : vector<100x256xf32>
    %c0_11 = arith.constant 0 : index
    %c0_12 = arith.constant 0 : index
    %13 = vector.load %arg6[%c0_11, %c0_12] : memref<100x256xf32, #tpu.memory_space<vmem>>, vector<100x256xf32>
    tpu.vector_store %arg6[%c0_11, %c0_12], %12 {strides = array<i32>} : memref<100x256xf32, #tpu.memory_space<vmem>>, vector<100x256xf32>,
    return
  }
  func.func @transform_0(%arg0: i32) -> (i32, i32) {
    %c0_i32 = arith.constant 0 : i32
    %c0_i32_0 = arith.constant 0 : i32
    return %arg0, %c0_i32 : i32, i32
  }
  func.func @transform_1(%arg0: i32) -> (i32, i32) {
    %c0_i32 = arith.constant 0 : i32
    %c0_i32_0 = arith.constant 0 : i32
    %c0_i32_1 = arith.constant 0 : i32
    return %c0_i32, %c0_i32_0 : i32, i32
  }
  func.func @transform_2(%arg0: i32) -> (i32, i32) {
    %c0_i32 = arith.constant 0 : i32
    %c0_i32_0 = arith.constant 0 : i32
    %c0_i32_1 = arith.constant 0 : i32
    return %c0_i32, %c0_i32_0 : i32, i32
  }
  func.func @transform_3(%arg0: i32) -> (i32, i32) {
    %c0_i32 = arith.constant 0 : i32
    %c0_i32_0 = arith.constant 0 : i32
    %c0_i32_1 = arith.constant 0 : i32
    return %c0_i32, %c0_i32_0 : i32, i32
  }
  func.func @transform_4(%arg0: i32) -> (i32, i32) {
    %c0_i32 = arith.constant 0 : i32
    %c0_i32_0 = arith.constant 0 : i32
    %c0_i32_1 = arith.constant 0 : i32
    return %c0_i32, %c0_i32_0 : i32, i32
  }
  func.func @transform_5(%arg0: i32) -> (i32, i32) {
    %c0_i32 = arith.constant 0 : i32
    %c0_i32_0 = arith.constant 0 : i32
    return %arg0, %c0_i32 : i32, i32
  }
}

</mosaic_0001>

<llo_original>
// kernel: tpu_custom_call.1
$region0: #{tpu_custom_call.1}
  #allocation0 [shape = 'u32[]', space=smem, size = 0x4, offset = 0x4, fixed_abs, tag = 'smem constant byte address 0x4 - core index']
  #allocation1 [shape = 'u32[72,128]{1,0:T(1,128)}', space=vmem, size = 0x9000, scoped, tag = 'internal scratch']
  %s0 = inlined_call_operand.vmem [shape: f32[100,32], index: 0, kind: input, shape index: {}]
  %s1 = inlined_call_operand.vmem [shape: f32[32,16], index: 1, kind: input, shape index: {}]
  %s2 = inlined_call_operand.vmem [shape: f32[1,16], index: 2, kind: input, shape index: {}]
  %s3 = inlined_call_operand.vmem [shape: f32[16,256], index: 3, kind: input, shape index: {}]
  %s4 = inlined_call_operand.vmem [shape: f32[1,256], index: 4, kind: input, shape index: {}]
  %s5 = inlined_call_operand.hbm [shape: f32[100,256], index: 5, kind: output, shape index: {}]
  %s6 = sld [smem:[#allocation0]]
  $region30: #{tpu_custom_call.1} parent=0
    _
  %s8 = ssub.s32 1, %s6
  %s9 = scalar_select 0, %s8, %s6
  $region1: #{tpu_custom_call.1} parent=0
    #allocation2 [shape = 'u8[106496]{0}', space=vmem, size = 0x1a000, scoped, tag = 'output window, operand 0, single buffered']
    #allocation3 [shape = 's32[1]{0}', space=sflag, size = 0x4, scoped, tag = 'scoped memory for tpu_custom_call.1']
    %10 = vsyncpa [#allocation3], 0
    // Predicated region
    $region2: #{tpu_custom_call.1} parent=1 // pred_check
      _
    $region3: #{tpu_custom_call.1} parent=1 // pred_check_branch
      %12 = sbr.rel (0) target = $region5
    $region4: #{tpu_custom_call.1} parent=1 // pred_region
      _
    $region5: #{tpu_custom_call.1} parent=1 // pred_fallthru
      _
    // Predicated region
    $region6: #{tpu_custom_call.1} parent=1 // pred_check
      _
    $region7: #{tpu_custom_call.1} parent=1 // pred_check_branch
      %14 = sbr.rel (0) target = $region9
    $region8: #{tpu_custom_call.1} parent=1 // pred_region
      _
    $region9: #{tpu_custom_call.1} parent=1 // pred_fallthru
      _
    // Predicated region
    $region10: #{tpu_custom_call.1} parent=1 // pred_check
      _
    $region11: #{tpu_custom_call.1} parent=1 // pred_check_branch
      %16 = sbr.rel (0) target = $region13
    $region12: #{tpu_custom_call.1} parent=1 // pred_region
      _
    $region13: #{tpu_custom_call.1} parent=1 // pred_fallthru
      _
    // Predicated region
    $region14: #{tpu_custom_call.1} parent=1 // pred_check
      _
    $region15: #{tpu_custom_call.1} parent=1 // pred_check_branch
      %18 = sbr.rel (0) target = $region17
    $region16: #{tpu_custom_call.1} parent=1 // pred_region
      _
    $region17: #{tpu_custom_call.1} parent=1 // pred_fallthru
      _
    // Predicated region
    $region18: #{tpu_custom_call.1} parent=1 // pred_check
      _
    $region19: #{tpu_custom_call.1} parent=1 // pred_check_branch
      %20 = sbr.rel (0) target = $region21
    $region20: #{tpu_custom_call.1} parent=1 // pred_region
      _
    $region21: #{tpu_custom_call.1} parent=1 // pred_fallthru
      _
    %v21 = vld [vmem:[%s0] sm:$0xff]
    %v22 = vld [vmem:[%s0 + $0x8] sm:$0xff]
    %v23 = vld [vmem:[%s0 + $0x10] sm:$0xff]
    %v24 = vld [vmem:[%s0 + $0x18] sm:$0xff]
    %v25 = vld [vmem:[%s0 + $0x20] sm:$0xff]
    %v26 = vld [vmem:[%s0 + $0x28] sm:$0xff]
    %v27 = vld [vmem:[%s0 + $0x30] sm:$0xff]
    %v28 = vld [vmem:[%s0 + $0x38] sm:$0xff]
    %v29 = vld [vmem:[%s0 + $0x40] sm:$0xff]
    %v30 = vld [vmem:[%s0 + $0x48] sm:$0xff]
    %v31 = vld [vmem:[%s0 + $0x50] sm:$0xff]
    %v32 = vld [vmem:[%s0 + $0x58] sm:$0xff]
    %v33 = vld [vmem:[%s0 + $0x60] sm:$0xf]
    %v34 = vld [vmem:[%s1] sm:$0xff]
    %v35 = vld [vmem:[%s1 + $0x8] sm:$0xff]
    %v36 = vld [vmem:[%s1 + $0x10] sm:$0xff]
    %v37 = vld [vmem:[%s1 + $0x18] sm:$0xff]
    %v38 = vld [vmem:[%s2] sm:$0x1]
    %v40 = vperm.slane %v38, 0
    %vm42 = vcmask 261120
    %v44 = vsel %vm42, %v21, 0
    %v47 = vsel %vm42, %v22, 0
    %v50 = vsel %vm42, %v23, 0
    %v53 = vsel %vm42, %v24, 0
    %v56 = vsel %vm42, %v25, 0
    %v59 = vsel %vm42, %v26, 0
    %v62 = vsel %vm42, %v27, 0
    %v65 = vsel %vm42, %v28, 0
    %v68 = vsel %vm42, %v29, 0
    %v71 = vsel %vm42, %v30, 0
    %v74 = vsel %vm42, %v31, 0
    %v77 = vsel %vm42, %v32, 0
    %v80 = vsel %vm42, %v33, 0
    %82 = vmatpush.msra.mxu0 0.0
    %83 = vmatpush.msra.mxu0 0.0
    %84 = vmatpush.msra.mxu0 0.0
    %85 = vmatpush.msra.mxu0 0.0
    %86 = vmatpush.msra.mxu0 0.0
    %87 = vmatpush.msra.mxu0 0.0
    %88 = vmatpush.msra.mxu0 0.0
    %89 = vmatpush.msra.mxu0 0.0
    %90 = vmatpush.msra.mxu0 0.0
    %91 = vmatpush.msra.mxu0 0.0
    %92 = vmatpush.msra.mxu0 0.0
    %93 = vmatpush.msra.mxu0 0.0
    %94 = vmatpush.msra.mxu0 %v37
    %95 = vmatpush.msra.mxu0 %v36
    %96 = vmatpush.msra.mxu0 %v35
    %97 = vmatpush.msra.mxu0 %v34
    %98 = vmatmul.f32.gmra.mxu0 %v44
    %v99 = vpop.f32.mrf.mxu0
    %v100 = vadd.f32 %v40, %v99
    %101 = vmatmul.f32.gmra.mxu0 %v47
    %v102 = vpop.f32.mrf.mxu0
    %v103 = vadd.f32 %v40, %v102
    %104 = vmatmul.f32.gmra.mxu0 %v50
    %v105 = vpop.f32.mrf.mxu0
    %v106 = vadd.f32 %v40, %v105
    %107 = vmatmul.f32.gmra.mxu0 %v53
    %v108 = vpop.f32.mrf.mxu0
    %v109 = vadd.f32 %v40, %v108
    %110 = vmatmul.f32.gmra.mxu0 %v56
    %v111 = vpop.f32.mrf.mxu0
    %v112 = vadd.f32 %v40, %v111
    %113 = vmatmul.f32.gmra.mxu0 %v59
    %v114 = vpop.f32.mrf.mxu0
    %v115 = vadd.f32 %v40, %v114
    %116 = vmatmul.f32.gmra.mxu0 %v62
    %v117 = vpop.f32.mrf.mxu0
    %v118 = vadd.f32 %v40, %v117
    %119 = vmatmul.f32.gmra.mxu0 %v65
    %v120 = vpop.f32.mrf.mxu0
    %v121 = vadd.f32 %v40, %v120
    %122 = vmatmul.f32.gmra.mxu0 %v68
    %v123 = vpop.f32.mrf.mxu0
    %v124 = vadd.f32 %v40, %v123
    %125 = vmatmul.f32.gmra.mxu0 %v71
    %v126 = vpop.f32.mrf.mxu0
    %v127 = vadd.f32 %v40, %v126
    %128 = vmatmul.f32.gmra.mxu0 %v74
    %v129 = vpop.f32.mrf.mxu0
    %v130 = vadd.f32 %v40, %v129
    %131 = vmatmul.f32.gmra.mxu0 %v77
    %v132 = vpop.f32.mrf.mxu0
    %v133 = vadd.f32 %v40, %v132
    %134 = vmatmul.f32.gmra.mxu0 %v80
    %v135 = vpop.f32.mrf.mxu0
    %v136 = vadd.f32 %v40, %v135
    %137 = vdwg.mxu0
    %v138 = vmax.f32 %v100, 0.0
    %v139 = vmax.f32 %v103, 0.0
    %v140 = vmax.f32 %v106, 0.0
    %v141 = vmax.f32 %v109, 0.0
    %v142 = vmax.f32 %v112, 0.0
    %v143 = vmax.f32 %v115, 0.0
    %v144 = vmax.f32 %v118, 0.0
    %v145 = vmax.f32 %v121, 0.0
    %v146 = vmax.f32 %v124, 0.0
    %v147 = vmax.f32 %v127, 0.0
    %v148 = vmax.f32 %v130, 0.0
    %v149 = vmax.f32 %v133, 0.0
    %v150 = vmax.f32 %v136, 0.0
    %v151 = vld [vmem:[%s3] sm:$0xff]
    %v152 = vld [vmem:[%s3 + $0x8] sm:$0xff]
    %v153 = vld [vmem:[%s3 + $0x10] sm:$0xff]
    %v154 = vld [vmem:[%s3 + $0x18] sm:$0xff]
    %v155 = vld [vmem:[%s4] sm:$0x3]
    %v157 = vperm.slane %v155, 0
    %v158 = vperm.slane %v155, 1
    %vm161 = vcmask 130048
    %v163 = vsel %vm161, %v138, 0
    %v166 = vsel %vm161, %v139, 0
    %v169 = vsel %vm161, %v140, 0
    %v172 = vsel %vm161, %v141, 0
    %v175 = vsel %vm161, %v142, 0
    %v178 = vsel %vm161, %v143, 0
    %v181 = vsel %vm161, %v144, 0
    %v184 = vsel %vm161, %v145, 0
    %v187 = vsel %vm161, %v146, 0
    %v190 = vsel %vm161, %v147, 0
    %v193 = vsel %vm161, %v148, 0
    %v196 = vsel %vm161, %v149, 0
    %v199 = vsel %vm161, %v150, 0
    %201 = vmatpush.msra.mxu0 0.0
    %202 = vmatpush.msra.mxu0 0.0
    %203 = vmatpush.msra.mxu0 0.0
    %204 = vmatpush.msra.mxu0 0.0
    %205 = vmatpush.msra.mxu0 0.0
    %206 = vmatpush.msra.mxu0 0.0
    %207 = vmatpush.msra.mxu0 0.0
    %208 = vmatpush.msra.mxu0 0.0
    %209 = vmatpush.msra.mxu0 0.0
    %210 = vmatpush.msra.mxu0 0.0
    %211 = vmatpush.msra.mxu0 0.0
    %212 = vmatpush.msra.mxu0 0.0
    %213 = vmatpush.msra.mxu0 0.0
    %214 = vmatpush.msra.mxu0 0.0
    %215 = vmatpush.msra.mxu0 %v153
    %216 = vmatpush.msra.mxu0 %v151
    %217 = vmatmul.f32.gmra.mxu0 %v163
    %v218 = vpop.f32.mrf.mxu0
    %v219 = vadd.f32 %v157, %v218
    %220 = vmatmul.f32.gmra.mxu0 %v166
    %v221 = vpop.f32.mrf.mxu0
    %v222 = vadd.f32 %v157, %v221
    %223 = vmatmul.f32.gmra.mxu0 %v169
    %v224 = vpop.f32.mrf.mxu0
    %v225 = vadd.f32 %v157, %v224
    %226 = vmatmul.f32.gmra.mxu0 %v172
    %v227 = vpop.f32.mrf.mxu0
    %v228 = vadd.f32 %v157, %v227
    %229 = vmatmul.f32.gmra.mxu0 %v175
    %v230 = vpop.f32.mrf.mxu0
    %v231 = vadd.f32 %v157, %v230
    %232 = vmatmul.f32.gmra.mxu0 %v178
    %v233 = vpop.f32.mrf.mxu0
    %v234 = vadd.f32 %v157, %v233
    %235 = vmatmul.f32.gmra.mxu0 %v181
    %v236 = vpop.f32.mrf.mxu0
    %v237 = vadd.f32 %v157, %v236
    %238 = vmatmul.f32.gmra.mxu0 %v184
    %v239 = vpop.f32.mrf.mxu0
    %v240 = vadd.f32 %v157, %v239
    %241 = vmatmul.f32.gmra.mxu0 %v187
    %v242 = vpop.f32.mrf.mxu0
    %v243 = vadd.f32 %v157, %v242
    %244 = vmatmul.f32.gmra.mxu0 %v190
    %v245 = vpop.f32.mrf.mxu0
    %v246 = vadd.f32 %v157, %v245
    %247 = vmatmul.f32.gmra.mxu0 %v193
    %v248 = vpop.f32.mrf.mxu0
    %v249 = vadd.f32 %v157, %v248
    %250 = vmatmul.f32.gmra.mxu0 %v196
    %v251 = vpop.f32.mrf.mxu0
    %v252 = vadd.f32 %v157, %v251
    %253 = vmatmul.f32.gmra.mxu0 %v199
    %v254 = vpop.f32.mrf.mxu0
    %v255 = vadd.f32 %v157, %v254
    %256 = vdwg.mxu0
    %257 = vmatpush.msra.mxu0 0.0
    %258 = vmatpush.msra.mxu0 0.0
    %259 = vmatpush.msra.mxu0 0.0
    %260 = vmatpush.msra.mxu0 0.0
    %261 = vmatpush.msra.mxu0 0.0
    %262 = vmatpush.msra.mxu0 0.0
    %263 = vmatpush.msra.mxu0 0.0
    %264 = vmatpush.msra.mxu0 0.0
    %265 = vmatpush.msra.mxu0 0.0
    %266 = vmatpush.msra.mxu0 0.0
    %267 = vmatpush.msra.mxu0 0.0
    %268 = vmatpush.msra.mxu0 0.0
    %269 = vmatpush.msra.mxu0 0.0
    %270 = vmatpush.msra.mxu0 0.0
    %271 = vmatpush.msra.mxu0 %v154
    %272 = vmatpush.msra.mxu0 %v152
    %273 = vmatmul.f32.gmra.mxu0 %v163
    %v274 = vpop.f32.mrf.mxu0
    %v275 = vadd.f32 %v158, %v274
    %276 = vmatmul.f32.gmra.mxu0 %v166
    %v277 = vpop.f32.mrf.mxu0
    %v278 = vadd.f32 %v158, %v277
    %279 = vmatmul.f32.gmra.mxu0 %v169
    %v280 = vpop.f32.mrf.mxu0
    %v281 = vadd.f32 %v158, %v280
    %282 = vmatmul.f32.gmra.mxu0 %v172
    %v283 = vpop.f32.mrf.mxu0
    %v284 = vadd.f32 %v158, %v283
    %285 = vmatmul.f32.gmra.mxu0 %v175
    %v286 = vpop.f32.mrf.mxu0
    %v287 = vadd.f32 %v158, %v286
    %288 = vmatmul.f32.gmra.mxu0 %v178
    %v289 = vpop.f32.mrf.mxu0
    %v290 = vadd.f32 %v158, %v289
    %291 = vmatmul.f32.gmra.mxu0 %v181
    %v292 = vpop.f32.mrf.mxu0
    %v293 = vadd.f32 %v158, %v292
    %294 = vmatmul.f32.gmra.mxu0 %v184
    %v295 = vpop.f32.mrf.mxu0
    %v296 = vadd.f32 %v158, %v295
    %297 = vmatmul.f32.gmra.mxu0 %v187
    %v298 = vpop.f32.mrf.mxu0
    %v299 = vadd.f32 %v158, %v298
    %300 = vmatmul.f32.gmra.mxu0 %v190
    %v301 = vpop.f32.mrf.mxu0
    %v302 = vadd.f32 %v158, %v301
    %303 = vmatmul.f32.gmra.mxu0 %v193
    %v304 = vpop.f32.mrf.mxu0
    %v305 = vadd.f32 %v158, %v304
    %306 = vmatmul.f32.gmra.mxu0 %v196
    %v307 = vpop.f32.mrf.mxu0
    %v308 = vadd.f32 %v158, %v307
    %309 = vmatmul.f32.gmra.mxu0 %v199
    %v310 = vpop.f32.mrf.mxu0
    %v311 = vadd.f32 %v158, %v310
    %312 = vdwg.mxu0
    %313 = vst [vmem:[#allocation2] sm:$0xff] %v219
    %314 = vst [vmem:[#allocation2 + $0x8] sm:$0xff] %v275
    %315 = vst [vmem:[#allocation2 + $0x10] sm:$0xff] %v222
    %316 = vst [vmem:[#allocation2 + $0x18] sm:$0xff] %v278
    %317 = vst [vmem:[#allocation2 + $0x20] sm:$0xff] %v225
    %318 = vst [vmem:[#allocation2 + $0x28] sm:$0xff] %v281
    %319 = vst [vmem:[#allocation2 + $0x30] sm:$0xff] %v228
    %320 = vst [vmem:[#allocation2 + $0x38] sm:$0xff] %v284
    %321 = vst [vmem:[#allocation2 + $0x40] sm:$0xff] %v231
    %322 = vst [vmem:[#allocation2 + $0x48] sm:$0xff] %v287
    %323 = vst [vmem:[#allocation2 + $0x50] sm:$0xff] %v234
    %324 = vst [vmem:[#allocation2 + $0x58] sm:$0xff] %v290
    %325 = vst [vmem:[#allocation2 + $0x60] sm:$0xff] %v237
    %326 = vst [vmem:[#allocation2 + $0x68] sm:$0xff] %v293
    %327 = vst [vmem:[#allocation2 + $0x70] sm:$0xff] %v240
    %328 = vst [vmem:[#allocation2 + $0x78] sm:$0xff] %v296
    %329 = vst [vmem:[#allocation2 + $0x80] sm:$0xff] %v243
    %330 = vst [vmem:[#allocation2 + $0x88] sm:$0xff] %v299
    %331 = vst [vmem:[#allocation2 + $0x90] sm:$0xff] %v246
    %332 = vst [vmem:[#allocation2 + $0x98] sm:$0xff] %v302
    %333 = vst [vmem:[#allocation2 + $0xa0] sm:$0xff] %v249
    %334 = vst [vmem:[#allocation2 + $0xa8] sm:$0xff] %v305
    %335 = vst [vmem:[#allocation2 + $0xb0] sm:$0xff] %v252
    %336 = vst [vmem:[#allocation2 + $0xb8] sm:$0xff] %v308
    %337 = vst [vmem:[#allocation2 + $0xc0] sm:$0xf] %v255
    %338 = vst [vmem:[#allocation2 + $0xc8] sm:$0xf] %v311
    // Predicated region
    $region22: #{tpu_custom_call.1} parent=1 // pred_check
      _
    $region23: #{tpu_custom_call.1} parent=1 // pred_check_branch
      %340 = sbr.rel (0) target = $region25
    $region24: #{tpu_custom_call.1} parent=1 // pred_region
      %342 = vsyncadd [#allocation3], 0
      %s343 = sshll.u32 [#allocation2], 4
      %s344 = int_to_ptr.vmem [resolvable:$true] %s343
      %s345 = sshll.u32 %s5, 4
      %s346 = int_to_ptr.hbm [resolvable:$true] %s345
      %351 = dma.vmem_to_hbm [thread:$0]  %s344, 3328, %s346, [#allocation3], 256, 256, 16
    $region25: #{tpu_custom_call.1} parent=1 // pred_fallthru
      _
    // Predicated region
    $region26: #{tpu_custom_call.1} parent=1 // pred_check
      _
    $region27: #{tpu_custom_call.1} parent=1 // pred_check_branch
      %353 = sbr.rel (0) target = $region29
    $region28: #{tpu_custom_call.1} parent=1 // pred_region
      %355 = dma.done [#allocation3], 3328
    $region29: #{tpu_custom_call.1} parent=1 // pred_fallthru
      _
    %356 = vsyncpa [#allocation3], 1

</llo_original>
